<compile_context>
chip_gen: v7x
topology: tpu7x:2x2x1
jax: 0.10.0
libtpu: 0.0.40
codegen_flags: <defaults>
</compile_context>

<pallas_src>
import functools

import jax
import jax.numpy as jnp
from jax.experimental import pallas as pl
from jax.experimental.pallas import tpu as pltpu


def _round_up(x, m):
    return ((x + m - 1) // m) * m


def _mlp_kernel(x_ref, *refs, n_layers):
    """Fused MLP for one row tile.

    refs = (w0, b0, w1, b1, ..., w{L-1}, b{L-1}, o_ref)
    Per layer: bf16 matmul on the MXU with f32 accumulation, f32 bias add,
    ReLU on all but the last layer.  Dropout is identity (eval mode).
    """
    o_ref = refs[-1]
    param_refs = refs[:-1]

    h = x_ref[...].astype(jnp.bfloat16)              # (TM, D_in) bf16
    acc = None
    for i in range(n_layers):
        w = param_refs[2 * i][...]                   # bf16 (in, out)
        b = param_refs[2 * i + 1][...]               # f32  (1, out)
        acc = jnp.dot(h, w, preferred_element_type=jnp.float32)
        acc = acc + b                                # f32 bias add (VPU)
        if i < n_layers - 1:
            acc = jnp.maximum(acc, 0.0)              # ReLU (f32 accumulator)
            h = acc.astype(jnp.bfloat16)             # back to bf16 for MXU
            # Dropout: identity at inference time.
    o_ref[...] = acc.astype(o_ref.dtype)             # (TM, n_class) store


def prepare_params(weights, biases):
    """One-time parameter prep (hoisted out of the hot forward path).

    Weights -> bf16 at their natural (in, out) shapes; biases -> f32 (1, out).
    """
    w_list = [jnp.asarray(w, jnp.bfloat16) for w in weights]
    b_list = [jnp.asarray(b, jnp.float32).reshape(1, -1) for b in biases]
    return w_list, b_list


def pos_tag_classifier_forward(x, w_list, b_list, *, tm=1024):
    """x: (batch, seq, in_dim).  Returns (batch, seq, n_class)."""
    B, T, D_in = x.shape
    n_layers = len(w_list)
    n_class = w_list[-1].shape[1]
    rows = B * T
    x2d = x.reshape(rows, D_in)                      # free reshape, no pad pass

    # Row tile: multiple of 8 sublanes, capped by the problem size, and capped
    # so the grid has >= 2 steps when possible (v7x has 2 TensorCores; a single
    # mega-tile would leave one idle).
    tm_eff = max(8, min(tm, _round_up(rows, 8)))
    if rows > 8:
        tm_eff = min(tm_eff, _round_up(pl.cdiv(rows, 2), 8))
    grid = (pl.cdiv(rows, tm_eff),)

    # x / out are row-blocked; weights & biases use full-array blocks with a
    # constant index_map so they are DMA'd into VMEM once and stay resident.
    in_specs = [pl.BlockSpec((tm_eff, D_in), lambda i: (i, 0))]
    operands = [x2d]
    for w, b in zip(w_list, b_list):
        in_specs.append(pl.BlockSpec(w.shape, lambda i: (0, 0)))
        in_specs.append(pl.BlockSpec(b.shape, lambda i: (0, 0)))
        operands.append(w)
        operands.append(b)

    # Advisory cost hint for the XLA scheduler around the custom call.
    flops = 2 * rows * sum(int(w.shape[0]) * int(w.shape[1]) for w in w_list)
    bytes_accessed = (
        x2d.size * x2d.dtype.itemsize
        + sum(int(w.size) * 2 for w in w_list)        # bf16 weights
        + sum(int(b.size) * 4 for b in b_list)        # f32 biases
        + rows * n_class * jnp.dtype(x.dtype).itemsize)

    out = pl.pallas_call(
        functools.partial(_mlp_kernel, n_layers=n_layers),
        out_shape=jax.ShapeDtypeStruct((rows, n_class), x.dtype),
        grid=grid,
        in_specs=in_specs,
        out_specs=pl.BlockSpec((tm_eff, n_class), lambda i: (i, 0)),
        compiler_params=pltpu.CompilerParams(
            dimension_semantics=("parallel",)),
        cost_estimate=pl.CostEstimate(
            flops=flops, transcendentals=0, bytes_accessed=bytes_accessed),
    )(*operands)

    return out.reshape(B, T, n_class)


def init_params(key, layer_dims, n_class):
    """Deterministic init matching the module's shapes (weights stored (in, out))."""
    dims_in = list(layer_dims)
    dims_out = list(layer_dims[1:]) + [n_class]
    weights, biases = [], []
    for din, dout in zip(dims_in, dims_out):
        kw, kb, key = jax.random.split(key, 3)
        bound = 1.0 / jnp.sqrt(din)
        w = jax.random.uniform(kw, (din, dout), jnp.float32, -bound, bound)
        b = jax.random.uniform(kb, (dout,), jnp.float32, -bound, bound)
        weights.append(w)
        biases.append(b)
    return weights, biases


def reference_forward(x, weights, biases):
    """Pure-f32 reference (PyTorch eval-mode semantics)."""
    h = x
    n_layers = len(weights)
    for i, (w, b) in enumerate(zip(weights, biases)):
        h = h @ w + b
        if i < n_layers - 1:
            h = jnp.maximum(h, 0.0)
    return h


if __name__ == "__main__":
    # opts equivalent: layer_ndims="[32, 64, 128]", n_class=16, dropout=0.1
    layer_dims = [32, 64, 128]
    n_class = 16
    B, T = 2, 8

    key = jax.random.PRNGKey(0)
    kx, kp = jax.random.split(key)
    x = jax.random.normal(kx, (B, T, layer_dims[0]), jnp.float32)
    weights, biases = init_params(kp, layer_dims, n_class)

    # Parameter prep hoisted out of the forward path (done once).
    w_list, b_list = prepare_params(weights, biases)

    out = pos_tag_classifier_forward(x, w_list, b_list)
    out = jax.block_until_ready(out)

    ref = reference_forward(x, weights, biases)
    assert out.shape == (B, T, n_class), out.shape
    # Kernel runs the matmuls in bf16 (f32 accumulation); compare against the
    # f32 reference with bf16-appropriate tolerances.
    assert jnp.allclose(out, ref, atol=2e-2, rtol=2e-2), (
        "mismatch vs reference; max abs err = "
        f"{float(jnp.max(jnp.abs(out - ref)))}")

    print("KERNEL_OK")
</pallas_src>

<mosaic_0001>
module attributes {stable_mosaic.version = 11 : i64} {
  func.func @_mlp_kernel(%arg0: i32, %arg1: memref<8x32xf32, #tpu.memory_space<vmem>>, %arg2: memref<32x64xbf16, #tpu.memory_space<vmem>>, %arg3: memref<1x64xf32, #tpu.memory_space<vmem>>, %arg4: memref<64x128xbf16, #tpu.memory_space<vmem>>, %arg5: memref<1x128xf32, #tpu.memory_space<vmem>>, %arg6: memref<128x16xbf16, #tpu.memory_space<vmem>>, %arg7: memref<1x16xf32, #tpu.memory_space<vmem>>, %arg8: memref<8x16xf32, #tpu.memory_space<vmem>>) attributes {dimension_semantics = [#tpu.dimension_semantics<parallel>], iteration_bounds = array<i64: 2>, scalar_prefetch = 0 : i64, scratch_operands = 0 : i64, tpu.core_type = #tpu.core_type<tc>, window_params = [{transform_indices = @transform_0, window_bounds = array<i64: 8, 32>}, {pipeline_mode = #tpu.pipeline_mode<synchronous>, transform_indices = @transform_1, window_bounds = array<i64: 32, 64>}, {pipeline_mode = #tpu.pipeline_mode<synchronous>, transform_indices = @transform_2, window_bounds = array<i64: 1, 64>}, {pipeline_mode = #tpu.pipeline_mode<synchronous>, transform_indices = @transform_3, window_bounds = array<i64: 64, 128>}, {pipeline_mode = #tpu.pipeline_mode<synchronous>, transform_indices = @transform_4, window_bounds = array<i64: 1, 128>}, {pipeline_mode = #tpu.pipeline_mode<synchronous>, transform_indices = @transform_5, window_bounds = array<i64: 128, 16>}, {pipeline_mode = #tpu.pipeline_mode<synchronous>, transform_indices = @transform_6, window_bounds = array<i64: 1, 16>}, {transform_indices = @transform_7, window_bounds = array<i64: 8, 16>}]} {
    %c0 = arith.constant 0 : index
    %c0_0 = arith.constant 0 : index
    %0 = vector.load %arg1[%c0, %c0_0] : memref<8x32xf32, #tpu.memory_space<vmem>>, vector<8x32xf32>
    %1 = arith.truncf %0 : vector<8x32xf32> to vector<8x32xbf16>
    %c0_1 = arith.constant 0 : index
    %c0_2 = arith.constant 0 : index
    %2 = vector.load %arg2[%c0_1, %c0_2] : memref<32x64xbf16, #tpu.memory_space<vmem>>, vector<32x64xbf16>
    %c0_3 = arith.constant 0 : index
    %c0_4 = arith.constant 0 : index
    %3 = vector.load %arg3[%c0_3, %c0_4] : memref<1x64xf32, #tpu.memory_space<vmem>>, vector<1x64xf32>
    %cst = arith.constant dense<0.000000e+00> : vector<8x64xf32>
    %4 = tpu.matmul %1, %2, %cst {dimension_numbers = #tpu.dot_dimension_numbers<[1], [0], [0], [1], [0, 0, 1, 1], [], []>} : vector<8x32xbf16>, vector<32x64xbf16>, vector<8x64xf32> -> vector<8x64xf32>
    %5 = vector.broadcast %3 : vector<1x64xf32> to vector<8x64xf32>
    %6 = arith.addf %4, %5 : vector<8x64xf32>
    %cst_5 = arith.constant 0.000000e+00 : f32
    %7 = vector.broadcast %cst_5 : f32 to vector<8x64xf32>
    %8 = arith.maximumf %6, %7 : vector<8x64xf32>
    %9 = arith.truncf %8 : vector<8x64xf32> to vector<8x64xbf16>
    %c0_6 = arith.constant 0 : index
    %c0_7 = arith.constant 0 : index
    %10 = vector.load %arg4[%c0_6, %c0_7] : memref<64x128xbf16, #tpu.memory_space<vmem>>, vector<64x128xbf16>
    %c0_8 = arith.constant 0 : index
    %c0_9 = arith.constant 0 : index
    %11 = vector.load %arg5[%c0_8, %c0_9] : memref<1x128xf32, #tpu.memory_space<vmem>>, vector<1x128xf32>
    %cst_10 = arith.constant dense<0.000000e+00> : vector<8x128xf32>
    %12 = tpu.matmul %9, %10, %cst_10 {dimension_numbers = #tpu.dot_dimension_numbers<[1], [0], [0], [1], [0, 0, 1, 1], [], []>} : vector<8x64xbf16>, vector<64x128xbf16>, vector<8x128xf32> -> vector<8x128xf32>
    %13 = vector.broadcast %11 : vector<1x128xf32> to vector<8x128xf32>
    %14 = arith.addf %12, %13 : vector<8x128xf32>
    %cst_11 = arith.constant 0.000000e+00 : f32
    %15 = vector.broadcast %cst_11 : f32 to vector<8x128xf32>
    %16 = arith.maximumf %14, %15 : vector<8x128xf32>
    %17 = arith.truncf %16 : vector<8x128xf32> to vector<8x128xbf16>
    %c0_12 = arith.constant 0 : index
    %c0_13 = arith.constant 0 : index
    %18 = vector.load %arg6[%c0_12, %c0_13] : memref<128x16xbf16, #tpu.memory_space<vmem>>, vector<128x16xbf16>
    %c0_14 = arith.constant 0 : index
    %c0_15 = arith.constant 0 : index
    %19 = vector.load %arg7[%c0_14, %c0_15] : memref<1x16xf32, #tpu.memory_space<vmem>>, vector<1x16xf32>
    %cst_16 = arith.constant dense<0.000000e+00> : vector<8x16xf32>
    %20 = tpu.matmul %17, %18, %cst_16 {dimension_numbers = #tpu.dot_dimension_numbers<[1], [0], [0], [1], [0, 0, 1, 1], [], []>} : vector<8x128xbf16>, vector<128x16xbf16>, vector<8x16xf32> -> vector<8x16xf32>
    %21 = vector.broadcast %19 : vector<1x16xf32> to vector<8x16xf32>
    %22 = arith.addf %20, %21 : vector<8x16xf32>
    %c0_17 = arith.constant 0 : index
    %c0_18 = arith.constant 0 : index
    %23 = vector.load %arg8[%c0_17, %c0_18] : memref<8x16xf32, #tpu.memory_space<vmem>>, vector<8x16xf32>
    tpu.vector_store %arg8[%c0_17, %c0_18], %22 {strides = array<i32>} : memref<8x16xf32, #tpu.memory_space<vmem>>, vector<8x16xf32>,
    return
  }
  func.func @transform_0(%arg0: i32) -> (i32, i32) {
    %c0_i32 = arith.constant 0 : i32
    %c0_i32_0 = arith.constant 0 : i32
    return %arg0, %c0_i32 : i32, i32
  }
  func.func @transform_1(%arg0: i32) -> (i32, i32) {
    %c0_i32 = arith.constant 0 : i32
    %c0_i32_0 = arith.constant 0 : i32
    %c0_i32_1 = arith.constant 0 : i32
    return %c0_i32, %c0_i32_0 : i32, i32
  }
  func.func @transform_2(%arg0: i32) -> (i32, i32) {
    %c0_i32 = arith.constant 0 : i32
    %c0_i32_0 = arith.constant 0 : i32
    %c0_i32_1 = arith.constant 0 : i32
    return %c0_i32, %c0_i32_0 : i32, i32
  }
  func.func @transform_3(%arg0: i32) -> (i32, i32) {
    %c0_i32 = arith.constant 0 : i32
    %c0_i32_0 = arith.constant 0 : i32
    %c0_i32_1 = arith.constant 0 : i32
    return %c0_i32, %c0_i32_0 : i32, i32
  }
  func.func @transform_4(%arg0: i32) -> (i32, i32) {
    %c0_i32 = arith.constant 0 : i32
    %c0_i32_0 = arith.constant 0 : i32
    %c0_i32_1 = arith.constant 0 : i32
    return %c0_i32, %c0_i32_0 : i32, i32
  }
  func.func @transform_5(%arg0: i32) -> (i32, i32) {
    %c0_i32 = arith.constant 0 : i32
    %c0_i32_0 = arith.constant 0 : i32
    %c0_i32_1 = arith.constant 0 : i32
    return %c0_i32, %c0_i32_0 : i32, i32
  }
  func.func @transform_6(%arg0: i32) -> (i32, i32) {
    %c0_i32 = arith.constant 0 : i32
    %c0_i32_0 = arith.constant 0 : i32
    %c0_i32_1 = arith.constant 0 : i32
    return %c0_i32, %c0_i32_0 : i32, i32
  }
  func.func @transform_7(%arg0: i32) -> (i32, i32) {
    %c0_i32 = arith.constant 0 : i32
    %c0_i32_0 = arith.constant 0 : i32
    return %arg0, %c0_i32 : i32, i32
  }
}

</mosaic_0001>

<llo_original>
// kernel: tpu_custom_call.1
$region0: #{tpu_custom_call.1}
  #allocation0 [shape = 'u32[]', space=smem, size = 0x4, offset = 0x4, fixed_abs, tag = 'smem constant byte address 0x4 - core index']
  #allocation1 [shape = 'u32[144,128]{1,0:T(1,128)}', space=vmem, size = 0x12000, scoped, tag = 'internal scratch']
  %s0 = inlined_call_operand.vmem [shape: f32[16,32], index: 0, kind: input, shape index: {}]
  %s1 = inlined_call_operand.vmem [shape: bf16[32,64], index: 1, kind: input, shape index: {}]
  %s2 = inlined_call_operand.vmem [shape: f32[1,64], index: 2, kind: input, shape index: {}]
  %s3 = inlined_call_operand.vmem [shape: bf16[64,128], index: 3, kind: input, shape index: {}]
  %s4 = inlined_call_operand.vmem [shape: f32[1,128], index: 4, kind: input, shape index: {}]
  %s5 = inlined_call_operand.vmem [shape: bf16[128,16], index: 5, kind: input, shape index: {}]
  %s6 = inlined_call_operand.vmem [shape: f32[1,16], index: 6, kind: input, shape index: {}]
  %s7 = inlined_call_operand.hbm [shape: f32[16,16], index: 7, kind: output, shape index: {}]
  %s8 = sld [smem:[#allocation0]]
  $region61: #{tpu_custom_call.1} parent=0
    _
  %s10 = ssub.s32 1, %s8
  %s11 = scalar_select 0, %s10, %s8
  $region1: #{tpu_custom_call.1} parent=0
    #allocation2 [shape = 'u8[8192]{0}', space=vmem, size = 0x2000, scoped, tag = 'output window, operand 0']
    #allocation3 [shape = 's32[2]{0}', space=sflag, size = 0x8, scoped, tag = 'scoped memory for tpu_custom_call.1']
    %12 = vsyncpa [#allocation3], 0
    %s13 = scalar_lea.sflag [#allocation3], 1
    %14 = vsyncpa %s13, 0
    loop: start=0, step=1, limit=4
    $region2: #{tpu_custom_call.1} parent=1 // loop_pre_header
      _
    $region3: #{tpu_custom_call.1} parent=1 // loop_header
      %s16 = sphi 0, %s20
      %p17 = scmp.ge.s32.totalorder %s16, 4
      %s26 = sphi 0, %s28
      %s29 = sphi 0, %s26
      %s30 = sphi 0, %s29
      %s46 = sphi 0, %s30
      %s50 = sphi 0, %s50
      %s52 = sphi 0, %s50
      %s53 = sphi 0, %s52
      %s67 = sphi 0, %s53
      %s71 = sphi 0, %s71
      %s73 = sphi 0, %s71
      %s74 = sphi 0, %s73
      %s88 = sphi 0, %s74
      %s92 = sphi 0, %s92
      %s94 = sphi 0, %s92
      %s95 = sphi 0, %s94
      %s109 = sphi 0, %s95
      %s113 = sphi 0, %s113
      %s115 = sphi 0, %s113
      %s116 = sphi 0, %s115
      %s130 = sphi 0, %s116
      %s134 = sphi 0, %s134
      %s136 = sphi 0, %s134
      %s137 = sphi 0, %s136
      %s151 = sphi 0, %s137
      %s155 = sphi 0, %s155
      %s157 = sphi 0, %s155
      %s158 = sphi 0, %s157
      %s172 = sphi 0, %s158
      %s178 = sphi 0, %s180
      %s181 = sphi 0, %s178
      %s182 = sphi 0, %s181
      %s198 = sphi 0, %s182
    $region4: #{tpu_custom_call.1} parent=1 // loop_header_branch
      %19 = sbr.rel (%p17) target = $region8
    $region5: #{tpu_custom_call.1} parent=1 // loop_body
      %s21 = ssub.s32 %s16, 1
      %s22 = ssub.s32 %s16, 2
      %s23 = sadd.s32 %s16, 1
      %s24 = ssub.s32 %s16, %s23
      %p25 = scmp.eq.s32.totalorder %s24, 0
      %s27 = sadd.s32 %s26, 1
      %s28 = scalar_select %p25, %s26, %s27
      %p31 = pneg %p25
      %p32 = scmp.eq.s32.totalorder %s16, 1
      %p33 = por %p31, %p32
      %p34 = scmp.ne.s32.totalorder %s26, %s29
      %p35 = scmp.eq.s32.totalorder %s16, 0
      %p36 = por %p34, %p35
      %p37 = scmp.ne.s32.totalorder %s26, %s29
      %p38 = scmp.eq.s32.totalorder %s21, 1
      %p39 = por %p37, %p38
      %p40 = scmp.ne.s32.totalorder %s29, %s30
      %p41 = scmp.eq.s32.totalorder %s21, 0
      %p42 = por %p40, %p41
      %p43 = scmp.ne.s32.totalorder %s29, %s30
      %p44 = scmp.eq.s32.totalorder %s22, 1
      %p45 = por %p43, %p44
      %p47 = scmp.ne.s32.totalorder %s30, %s46
      %p48 = scmp.eq.s32.totalorder %s22, 0
      %p49 = por %p47, %p48
      %s51 = sadd.s32 %s50, 1
      %p54 = scmp.eq.s32.totalorder %s16, 1
      %p55 = scmp.ne.s32.totalorder %s50, %s52
      %p56 = scmp.eq.s32.totalorder %s16, 0
      %p57 = por %p55, %p56
      %p58 = scmp.ne.s32.totalorder %s50, %s52
      %p59 = scmp.eq.s32.totalorder %s21, 1
      %p60 = por %p58, %p59
      %p61 = scmp.ne.s32.totalorder %s52, %s53
      %p62 = scmp.eq.s32.totalorder %s21, 0
      %p63 = por %p61, %p62
      %p64 = scmp.ne.s32.totalorder %s52, %s53
      %p65 = scmp.eq.s32.totalorder %s22, 1
      %p66 = por %p64, %p65
      %p68 = scmp.ne.s32.totalorder %s53, %s67
      %p69 = scmp.eq.s32.totalorder %s22, 0
      %p70 = por %p68, %p69
      %s72 = sadd.s32 %s71, 1
      %p75 = scmp.eq.s32.totalorder %s16, 1
      %p76 = scmp.ne.s32.totalorder %s71, %s73
      %p77 = scmp.eq.s32.totalorder %s16, 0
      %p78 = por %p76, %p77
      %p79 = scmp.ne.s32.totalorder %s71, %s73
      %p80 = scmp.eq.s32.totalorder %s21, 1
      %p81 = por %p79, %p80
      %p82 = scmp.ne.s32.totalorder %s73, %s74
      %p83 = scmp.eq.s32.totalorder %s21, 0
      %p84 = por %p82, %p83
      %p85 = scmp.ne.s32.totalorder %s73, %s74
      %p86 = scmp.eq.s32.totalorder %s22, 1
      %p87 = por %p85, %p86
      %p89 = scmp.ne.s32.totalorder %s74, %s88
      %p90 = scmp.eq.s32.totalorder %s22, 0
      %p91 = por %p89, %p90
      %s93 = sadd.s32 %s92, 1
      %p96 = scmp.eq.s32.totalorder %s16, 1
      %p97 = scmp.ne.s32.totalorder %s92, %s94
      %p98 = scmp.eq.s32.totalorder %s16, 0
      %p99 = por %p97, %p98
      %p100 = scmp.ne.s32.totalorder %s92, %s94
      %p101 = scmp.eq.s32.totalorder %s21, 1
      %p102 = por %p100, %p101
      %p103 = scmp.ne.s32.totalorder %s94, %s95
      %p104 = scmp.eq.s32.totalorder %s21, 0
      %p105 = por %p103, %p104
      %p106 = scmp.ne.s32.totalorder %s94, %s95
      %p107 = scmp.eq.s32.totalorder %s22, 1
      %p108 = por %p106, %p107
      %p110 = scmp.ne.s32.totalorder %s95, %s109
      %p111 = scmp.eq.s32.totalorder %s22, 0
      %p112 = por %p110, %p111
      %s114 = sadd.s32 %s113, 1
      %p117 = scmp.eq.s32.totalorder %s16, 1
      %p118 = scmp.ne.s32.totalorder %s113, %s115
      %p119 = scmp.eq.s32.totalorder %s16, 0
      %p120 = por %p118, %p119
      %p121 = scmp.ne.s32.totalorder %s113, %s115
      %p122 = scmp.eq.s32.totalorder %s21, 1
      %p123 = por %p121, %p122
      %p124 = scmp.ne.s32.totalorder %s115, %s116
      %p125 = scmp.eq.s32.totalorder %s21, 0
      %p126 = por %p124, %p125
      %p127 = scmp.ne.s32.totalorder %s115, %s116
      %p128 = scmp.eq.s32.totalorder %s22, 1
      %p129 = por %p127, %p128
      %p131 = scmp.ne.s32.totalorder %s116, %s130
      %p132 = scmp.eq.s32.totalorder %s22, 0
      %p133 = por %p131, %p132
      %s135 = sadd.s32 %s134, 1
      %p138 = scmp.eq.s32.totalorder %s16, 1
      %p139 = scmp.ne.s32.totalorder %s134, %s136
      %p140 = scmp.eq.s32.totalorder %s16, 0
      %p141 = por %p139, %p140
      %p142 = scmp.ne.s32.totalorder %s134, %s136
      %p143 = scmp.eq.s32.totalorder %s21, 1
      %p144 = por %p142, %p143
      %p145 = scmp.ne.s32.totalorder %s136, %s137
      %p146 = scmp.eq.s32.totalorder %s21, 0
      %p147 = por %p145, %p146
      %p148 = scmp.ne.s32.totalorder %s136, %s137
      %p149 = scmp.eq.s32.totalorder %s22, 1
      %p150 = por %p148, %p149
      %p152 = scmp.ne.s32.totalorder %s137, %s151
      %p153 = scmp.eq.s32.totalorder %s22, 0
      %p154 = por %p152, %p153
      %s156 = sadd.s32 %s155, 1
      %p159 = scmp.eq.s32.totalorder %s16, 1
      %p160 = scmp.ne.s32.totalorder %s155, %s157
      %p161 = scmp.eq.s32.totalorder %s16, 0
      %p162 = por %p160, %p161
      %p163 = scmp.ne.s32.totalorder %s155, %s157
      %p164 = scmp.eq.s32.totalorder %s21, 1
      %p165 = por %p163, %p164
      %p166 = scmp.ne.s32.totalorder %s157, %s158
      %p167 = scmp.eq.s32.totalorder %s21, 0
      %p168 = por %p166, %p167
      %p169 = scmp.ne.s32.totalorder %s157, %s158
      %p170 = scmp.eq.s32.totalorder %s22, 1
      %p171 = por %p169, %p170
      %p173 = scmp.ne.s32.totalorder %s158, %s172
      %p174 = scmp.eq.s32.totalorder %s22, 0
      %p175 = por %p173, %p174
      %s176 = ssub.s32 %s16, %s23
      %p177 = scmp.eq.s32.totalorder %s176, 0
      %s179 = sadd.s32 %s178, 1
      %s180 = scalar_select %p177, %s178, %s179
      %p183 = pneg %p177
      %p184 = scmp.eq.s32.totalorder %s16, 1
      %p185 = por %p183, %p184
      %p186 = scmp.ne.s32.totalorder %s178, %s181
      %p187 = scmp.eq.s32.totalorder %s16, 0
      %p188 = por %p186, %p187
      %p189 = scmp.ne.s32.totalorder %s178, %s181
      %p190 = scmp.eq.s32.totalorder %s21, 1
      %p191 = por %p189, %p190
      %p192 = scmp.ne.s32.totalorder %s181, %s182
      %p193 = scmp.eq.s32.totalorder %s21, 0
      %p194 = por %p192, %p193
      %p195 = scmp.ne.s32.totalorder %s181, %s182
      %p196 = scmp.eq.s32.totalorder %s22, 1
      %p197 = por %p195, %p196
      %p199 = scmp.ne.s32.totalorder %s182, %s198
      %p200 = scmp.eq.s32.totalorder %s22, 0
      %p201 = por %p199, %p200
      %p202 = scmp.le.s32.totalorder 1, %s16
      %p203 = scmp.lt.s32.totalorder %s16, 3
      %p204 = pnand %p202, %p203
      %p205 = pneg %p204
      // Predicated region
      $region9: #{tpu_custom_call.1} parent=5 // pred_check
        _
      $region10: #{tpu_custom_call.1} parent=5 // pred_check_branch
        %207 = sbr.rel (%p204) target = $region12
      $region11: #{tpu_custom_call.1} parent=5 // pred_region
        %s208 = ssub.s32 %s16, 1
        // Predicated region
        $region13: #{tpu_custom_call.1} parent=11 // pred_check
          %p209 = pneg %p63
        $region14: #{tpu_custom_call.1} parent=11 // pred_check_branch
          %211 = sbr.rel (%p209) target = $region16
        $region15: #{tpu_custom_call.1} parent=11 // pred_region
          _
        $region16: #{tpu_custom_call.1} parent=11 // pred_fallthru
          _
        // Predicated region
        $region17: #{tpu_custom_call.1} parent=11 // pred_check
          %p212 = pneg %p84
        $region18: #{tpu_custom_call.1} parent=11 // pred_check_branch
          %214 = sbr.rel (%p212) target = $region20
        $region19: #{tpu_custom_call.1} parent=11 // pred_region
          _
        $region20: #{tpu_custom_call.1} parent=11 // pred_fallthru
          _
        // Predicated region
        $region21: #{tpu_custom_call.1} parent=11 // pred_check
          %p215 = pneg %p105
        $region22: #{tpu_custom_call.1} parent=11 // pred_check_branch
          %217 = sbr.rel (%p215) target = $region24
        $region23: #{tpu_custom_call.1} parent=11 // pred_region
          _
        $region24: #{tpu_custom_call.1} parent=11 // pred_fallthru
          _
        // Predicated region
        $region25: #{tpu_custom_call.1} parent=11 // pred_check
          %p218 = pneg %p126
        $region26: #{tpu_custom_call.1} parent=11 // pred_check_branch
          %220 = sbr.rel (%p218) target = $region28
        $region27: #{tpu_custom_call.1} parent=11 // pred_region
          _
        $region28: #{tpu_custom_call.1} parent=11 // pred_fallthru
          _
        // Predicated region
        $region29: #{tpu_custom_call.1} parent=11 // pred_check
          %p221 = pneg %p147
        $region30: #{tpu_custom_call.1} parent=11 // pred_check_branch
          %223 = sbr.rel (%p221) target = $region32
        $region31: #{tpu_custom_call.1} parent=11 // pred_region
          _
        $region32: #{tpu_custom_call.1} parent=11 // pred_fallthru
          _
        // Predicated region
        $region33: #{tpu_custom_call.1} parent=11 // pred_check
          %p224 = pneg %p168
        $region34: #{tpu_custom_call.1} parent=11 // pred_check_branch
          %226 = sbr.rel (%p224) target = $region36
        $region35: #{tpu_custom_call.1} parent=11 // pred_region
          _
        $region36: #{tpu_custom_call.1} parent=11 // pred_fallthru
          _
      $region12: #{tpu_custom_call.1} parent=5 // pred_fallthru
        _
      %p227 = scmp.lt.s32.totalorder %s16, 2
      // Predicated region
      $region37: #{tpu_custom_call.1} parent=5 // pred_check
        %p228 = pneg %p227
      $region38: #{tpu_custom_call.1} parent=5 // pred_check_branch
        %230 = sbr.rel (%p228) target = $region40
      $region39: #{tpu_custom_call.1} parent=5 // pred_region
        // Predicated region
        $region41: #{tpu_custom_call.1} parent=39 // pred_check
          %p231 = pneg %p36
        $region42: #{tpu_custom_call.1} parent=39 // pred_check_branch
          %233 = sbr.rel (%p231) target = $region44
        $region43: #{tpu_custom_call.1} parent=39 // pred_region
          %p234 = scmp.lt.s32.totalorder %s16, 1
          %s235 = scalar_select %p234, %s16, 1
          %s236 = smul.addr %s235, 8
          %s237 = scalar_lea.vmem %s0, %s236
        $region44: #{tpu_custom_call.1} parent=39 // pred_fallthru
          _
      $region40: #{tpu_custom_call.1} parent=5 // pred_fallthru
        _
      %p238 = scmp.le.s32.totalorder 1, %s16
      %p239 = scmp.lt.s32.totalorder %s16, 3
      %p240 = pnand %p238, %p239
      %p241 = pneg %p240
      // Predicated region
      $region45: #{tpu_custom_call.1} parent=5 // pred_check
        _
      $region46: #{tpu_custom_call.1} parent=5 // pred_check_branch
        %243 = sbr.rel (%p240) target = $region48
      $region47: #{tpu_custom_call.1} parent=5 // pred_region
        %s244 = ssub.s32 %s16, 1
        %p245 = scmp.lt.s32.totalorder %s21, 1
        %s246 = scalar_select %p245, %s21, 1
        %s247 = smul.addr %s246, 8
        %s248 = scalar_lea.vmem %s0, %s247
        %p249 = pneg %p42
        %p250 = pneg %p39
        %p251 = pneg %p63
        %p252 = pneg %p60
        %p253 = pneg %p84
        %p254 = pneg %p81
        %p255 = pneg %p105
        %p256 = pneg %p102
        %p257 = pneg %p126
        %p258 = pneg %p123
        %p259 = pneg %p147
        %p260 = pneg %p144
        %p261 = pneg %p168
        %p262 = pneg %p165
        %p263 = pneg %p194
        %p264 = pneg %p191
        %s265 = sand.u32 %s181, 1
        %s266 = scalar_lea.sflag [#allocation3], %s265
        %s267 = sand.u32 %s181, 1
        %s268 = smul.addr %s267, 8
        %s269 = scalar_lea.vmem [#allocation2], %s268
        %p270 = scmp.lt.s32.totalorder %s21, 1
        %s271 = scalar_select %p270, %s21, 1
        %s272 = smul.addr %s271, 8
        %s273 = scalar_lea.vmem %s0, %s272
        %v275 = vld [vmem:[%s273] sm:$0xff]
        %v276 = vpack.c.bf16 %v275, %v275
        %v277 = vld [vmem:[%s1] sm:$0xf]
        %v278 = vld [vmem:[%s1 + $0x4] sm:$0xf]
        %v279 = vld [vmem:[%s1 + $0x8] sm:$0xf]
        %v280 = vld [vmem:[%s1 + $0xc] sm:$0xf]
        %v281 = vld [vmem:[%s2] sm:$0x1]
        %v283 = vlaneseq
        %v284 = vshrl.u32 %v283, 7
        %v285 = vsub.s32 0, %v284
        %v286 = vrot.slane %v281, %v285
        %v292 = vunpack.c.l.b16 %v277
        %v293 = vunpack.c.l.b16 %v278
        %v294 = vunpack.c.l.b16 %v279
        %v295 = vunpack.c.l.b16 %v280
        %v296 = vpack.c.b16 %v293, %v292
        %v297 = vpack.c.b16 %v295, %v294
        %vm300 = vcmask 261120
        %v302 = vsel %vm300, %v276, 0
        %304 = vmatprep.subr.bf16.mxu0 0
        %305 = vmatpush1.bf16.msra.mxu0 %v296
        %306 = vmatprep.subr.bf16.mxu0 0
        %307 = vmatpush1.bf16.msra.mxu0 %v297
        %308 = vmatprep.subr.bf16.mxu0 0
        %309 = vmatpush1.bf16.msra.mxu0 0
        %310 = vmatprep.subr.bf16.mxu0 0
        %311 = vmatpush1.bf16.msra.mxu0 0
        %312 = vmatprep.subr.bf16.mxu0 0
        %313 = vmatpush1.bf16.msra.mxu0 0
        %314 = vmatprep.subr.bf16.mxu0 0
        %315 = vmatpush1.bf16.msra.mxu0 0
        %316 = vmatprep.subr.bf16.mxu0 0
        %317 = vmatpush1.bf16.msra.mxu0 0
        %318 = vmatprep.subr.bf16.mxu0 0
        %319 = vmatpush1.bf16.msra.mxu0 0
        %320 = vmatprep.subr.bf16.mxu0 0
        %321 = vmatpush1.bf16.msra.mxu0 0
        %322 = vmatprep.subr.bf16.mxu0 0
        %323 = vmatpush1.bf16.msra.mxu0 0
        %324 = vmatprep.subr.bf16.mxu0 0
        %325 = vmatpush1.bf16.msra.mxu0 0
        %326 = vmatprep.subr.bf16.mxu0 0
        %327 = vmatpush1.bf16.msra.mxu0 0
        %328 = vmatprep.subr.bf16.mxu0 0
        %329 = vmatpush1.bf16.msra.mxu0 0
        %330 = vmatprep.subr.bf16.mxu0 0
        %331 = vmatpush1.bf16.msra.mxu0 0
        %332 = vmatprep.subr.bf16.mxu0 0
        %333 = vmatpush1.bf16.msra.mxu0 0
        %334 = vmatprep.subr.bf16.mxu0 0
        %335 = vmatpush1.bf16.msra.mxu0 0
        %336 = vmatprep.mubr.bf16.mxu0 0
        %337 = vmatmul.mubr.bf16.gmra.mrb[0].mxu0 %v302
        %v338 = vpop.f32.mrb[0].mxu0
        %v339 = vadd.f32 %v286, %v338
        %v340 = vpop.f32.mrb[0].mxu0
        %v341 = vpop.f32.mrb[0].mxu0
        %v342 = vpop.f32.mrb[0].mxu0
        %343 = vdwg.mxu0
        %v344 = vmax.f32 %v339, 0.0
        %v345 = vpack.c.bf16 %v344, %v344
        %v346 = vld [vmem:[%s3] sm:$0xf]
        %v347 = vld [vmem:[%s3 + $0x4] sm:$0xf]
        %v348 = vld [vmem:[%s3 + $0x8] sm:$0xf]
        %v349 = vld [vmem:[%s3 + $0xc] sm:$0xf]
        %v350 = vld [vmem:[%s3 + $0x10] sm:$0xf]
        %v351 = vld [vmem:[%s3 + $0x14] sm:$0xf]
        %v352 = vld [vmem:[%s3 + $0x18] sm:$0xf]
        %v353 = vld [vmem:[%s3 + $0x1c] sm:$0xf]
        %v354 = vld [vmem:[%s4] sm:$0x1]
        %v356 = vlaneseq
        %v357 = vshrl.u32 %v356, 7
        %v358 = vsub.s32 0, %v357
        %v359 = vrot.slane %v354, %v358
        %v369 = vunpack.c.l.b16 %v346
        %v370 = vunpack.c.l.b16 %v347
        %v371 = vunpack.c.l.b16 %v348
        %v372 = vunpack.c.l.b16 %v349
        %v373 = vunpack.c.l.b16 %v350
        %v374 = vunpack.c.l.b16 %v351
        %v375 = vunpack.c.l.b16 %v352
        %v376 = vunpack.c.l.b16 %v353
        %v377 = vpack.c.b16 %v370, %v369
        %v378 = vpack.c.b16 %v372, %v371
        %v379 = vpack.c.b16 %v374, %v373
        %v380 = vpack.c.b16 %v376, %v375
        %vm385 = vcmask 523264
        %v387 = vsel %vm385, %v345, 0
        %389 = vmatprep.subr.bf16.mxu0 0
        %390 = vmatpush1.bf16.msra.mxu0 %v377
        %391 = vmatprep.subr.bf16.mxu0 0
        %392 = vmatpush1.bf16.msra.mxu0 %v378
        %393 = vmatprep.subr.bf16.mxu0 0
        %394 = vmatpush1.bf16.msra.mxu0 %v379
        %395 = vmatprep.subr.bf16.mxu0 0
        %396 = vmatpush1.bf16.msra.mxu0 %v380
        %397 = vmatprep.subr.bf16.mxu0 0
        %398 = vmatpush1.bf16.msra.mxu0 0
        %399 = vmatprep.subr.bf16.mxu0 0
        %400 = vmatpush1.bf16.msra.mxu0 0
        %401 = vmatprep.subr.bf16.mxu0 0
        %402 = vmatpush1.bf16.msra.mxu0 0
        %403 = vmatprep.subr.bf16.mxu0 0
        %404 = vmatpush1.bf16.msra.mxu0 0
        %405 = vmatprep.subr.bf16.mxu0 0
        %406 = vmatpush1.bf16.msra.mxu0 0
        %407 = vmatprep.subr.bf16.mxu0 0
        %408 = vmatpush1.bf16.msra.mxu0 0
        %409 = vmatprep.subr.bf16.mxu0 0
        %410 = vmatpush1.bf16.msra.mxu0 0
        %411 = vmatprep.subr.bf16.mxu0 0
        %412 = vmatpush1.bf16.msra.mxu0 0
        %413 = vmatprep.subr.bf16.mxu0 0
        %414 = vmatpush1.bf16.msra.mxu0 0
        %415 = vmatprep.subr.bf16.mxu0 0
        %416 = vmatpush1.bf16.msra.mxu0 0
        %417 = vmatprep.subr.bf16.mxu0 0
        %418 = vmatpush1.bf16.msra.mxu0 0
        %419 = vmatprep.subr.bf16.mxu0 0
        %420 = vmatpush1.bf16.msra.mxu0 0
        %421 = vmatprep.mubr.bf16.mxu0 0
        %422 = vmatmul.mubr.bf16.gmra.mrb[0].mxu0 %v387
        %v423 = vpop.f32.mrb[0].mxu0
        %v424 = vadd.f32 %v359, %v423
        %v425 = vpop.f32.mrb[0].mxu0
        %v426 = vpop.f32.mrb[0].mxu0
        %v427 = vpop.f32.mrb[0].mxu0
        %428 = vdwg.mxu0
        %v429 = vmax.f32 %v424, 0.0
        %v430 = vpack.c.bf16 %v429, %v429
        %v431 = vld [vmem:[%s5] sm:$0xf]
        %v432 = vld [vmem:[%s5 + $0x4] sm:$0xf]
        %v433 = vld [vmem:[%s5 + $0x8] sm:$0xf]
        %v434 = vld [vmem:[%s5 + $0xc] sm:$0xf]
        %v435 = vld [vmem:[%s5 + $0x10] sm:$0xf]
        %v436 = vld [vmem:[%s5 + $0x14] sm:$0xf]
        %v437 = vld [vmem:[%s5 + $0x18] sm:$0xf]
        %v438 = vld [vmem:[%s5 + $0x1c] sm:$0xf]
        %v439 = vld [vmem:[%s5 + $0x20] sm:$0xf]
        %v440 = vld [vmem:[%s5 + $0x24] sm:$0xf]
        %v441 = vld [vmem:[%s5 + $0x28] sm:$0xf]
        %v442 = vld [vmem:[%s5 + $0x2c] sm:$0xf]
        %v443 = vld [vmem:[%s5 + $0x30] sm:$0xf]
        %v444 = vld [vmem:[%s5 + $0x34] sm:$0xf]
        %v445 = vld [vmem:[%s5 + $0x38] sm:$0xf]
        %v446 = vld [vmem:[%s5 + $0x3c] sm:$0xf]
        %v447 = vld [vmem:[%s6] sm:$0x1]
        %v449 = vlaneseq
        %v450 = vshrl.u32 %v449, 7
        %v451 = vsub.s32 0, %v450
        %v452 = vrot.slane %v447, %v451
        %v470 = vunpack.c.l.b16 %v431
        %v471 = vunpack.c.l.b16 %v432
        %v472 = vunpack.c.l.b16 %v433
        %v473 = vunpack.c.l.b16 %v434
        %v474 = vunpack.c.l.b16 %v435
        %v475 = vunpack.c.l.b16 %v436
        %v476 = vunpack.c.l.b16 %v437
        %v477 = vunpack.c.l.b16 %v438
        %v478 = vunpack.c.l.b16 %v439
        %v479 = vunpack.c.l.b16 %v440
        %v480 = vunpack.c.l.b16 %v441
        %v481 = vunpack.c.l.b16 %v442
        %v482 = vunpack.c.l.b16 %v443
        %v483 = vunpack.c.l.b16 %v444
        %v484 = vunpack.c.l.b16 %v445
        %v485 = vunpack.c.l.b16 %v446
        %v486 = vpack.c.b16 %v471, %v470
        %v487 = vpack.c.b16 %v473, %v472
        %v488 = vpack.c.b16 %v475, %v474
        %v489 = vpack.c.b16 %v477, %v476
        %v490 = vpack.c.b16 %v479, %v478
        %v491 = vpack.c.b16 %v481, %v480
        %v492 = vpack.c.b16 %v483, %v482
        %v493 = vpack.c.b16 %v485, %v484
        %502 = vmatprep.subr.bf16.mxu0 0
        %503 = vmatpush1.bf16.msra.mxu0 %v486
        %504 = vmatprep.subr.bf16.mxu0 0
        %505 = vmatpush1.bf16.msra.mxu0 %v487
        %506 = vmatprep.subr.bf16.mxu0 0
        %507 = vmatpush1.bf16.msra.mxu0 %v488
        %508 = vmatprep.subr.bf16.mxu0 0
        %509 = vmatpush1.bf16.msra.mxu0 %v489
        %510 = vmatprep.subr.bf16.mxu0 0
        %511 = vmatpush1.bf16.msra.mxu0 %v490
        %512 = vmatprep.subr.bf16.mxu0 0
        %513 = vmatpush1.bf16.msra.mxu0 %v491
        %514 = vmatprep.subr.bf16.mxu0 0
        %515 = vmatpush1.bf16.msra.mxu0 %v492
        %516 = vmatprep.subr.bf16.mxu0 0
        %517 = vmatpush1.bf16.msra.mxu0 %v493
        %518 = vmatprep.subr.bf16.mxu0 0
        %519 = vmatpush1.bf16.msra.mxu0 0
        %520 = vmatprep.subr.bf16.mxu0 0
        %521 = vmatpush1.bf16.msra.mxu0 0
        %522 = vmatprep.subr.bf16.mxu0 0
        %523 = vmatpush1.bf16.msra.mxu0 0
        %524 = vmatprep.subr.bf16.mxu0 0
        %525 = vmatpush1.bf16.msra.mxu0 0
        %526 = vmatprep.subr.bf16.mxu0 0
        %527 = vmatpush1.bf16.msra.mxu0 0
        %528 = vmatprep.subr.bf16.mxu0 0
        %529 = vmatpush1.bf16.msra.mxu0 0
        %530 = vmatprep.subr.bf16.mxu0 0
        %531 = vmatpush1.bf16.msra.mxu0 0
        %532 = vmatprep.subr.bf16.mxu0 0
        %533 = vmatpush1.bf16.msra.mxu0 0
        %534 = vmatprep.mubr.bf16.mxu0 0
        %535 = vmatmul.mubr.bf16.gmra.mrb[0].mxu0 %v430
        %v536 = vpop.f32.mrb[0].mxu0
        %v537 = vadd.f32 %v452, %v536
        %v538 = vpop.f32.mrb[0].mxu0
        %v539 = vpop.f32.mrb[0].mxu0
        %v540 = vpop.f32.mrb[0].mxu0
        %541 = vdwg.mxu0
        %vm542 = vcmask 130048
        %543 = vst.msk [vmem:[%s269] sm:$0xff] %vm542, %v537
        %s544 = sand.u32 %s181, 1
        %s545 = scalar_lea.sflag [#allocation3], %s544
        %s546 = sand.u32 %s181, 1
        %s547 = smul.addr %s546, 8
        %s548 = scalar_lea.vmem [#allocation2], %s547
        // Predicated region
        $region49: #{tpu_custom_call.1} parent=47 // pred_check
          %p549 = pneg %p191
        $region50: #{tpu_custom_call.1} parent=47 // pred_check_branch
          %551 = sbr.rel (%p549) target = $region52
        $region51: #{tpu_custom_call.1} parent=47 // pred_region
          %s553 = ssub.s32 128, 128
          %554 = vsyncadd %s545, %s553
          %s555 = smul.addr %s21, 128
          %s556 = scalar_lea.hbm %s7, %s555
          %s558 = sshll.u32 %s548, 4
          %s559 = int_to_ptr.vmem [resolvable:$true] %s558
          %561 = dma.vmem_to_hbm [thread:$0]  %s559, 128, %s556, %s545
        $region52: #{tpu_custom_call.1} parent=47 // pred_fallthru
          _
      $region48: #{tpu_custom_call.1} parent=5 // pred_fallthru
        _
      %p562 = scmp.le.s32.totalorder 2, %s16
      // Predicated region
      $region53: #{tpu_custom_call.1} parent=5 // pred_check
        %p563 = pneg %p562
      $region54: #{tpu_custom_call.1} parent=5 // pred_check_branch
        %565 = sbr.rel (%p563) target = $region56
      $region55: #{tpu_custom_call.1} parent=5 // pred_region
        %s566 = ssub.s32 %s16, 2
        // Predicated region
        $region57: #{tpu_custom_call.1} parent=55 // pred_check
          %p567 = pneg %p197
        $region58: #{tpu_custom_call.1} parent=55 // pred_check_branch
          %569 = sbr.rel (%p567) target = $region60
        $region59: #{tpu_custom_call.1} parent=55 // pred_region
          %s570 = sand.u32 %s182, 1
          %s571 = scalar_lea.sflag [#allocation3], %s570
          %s572 = sand.u32 %s182, 1
          %s573 = smul.addr %s572, 8
          %s574 = scalar_lea.vmem [#allocation2], %s573
          %575 = dma.done %s571, 128
        $region60: #{tpu_custom_call.1} parent=55 // pred_fallthru
          _
      $region56: #{tpu_custom_call.1} parent=5 // pred_fallthru
        _
    $region6: #{tpu_custom_call.1} parent=1 // loop_footer
      %s20 = sadd.s32 1, %s16
    $region7: #{tpu_custom_call.1} parent=1 // loop_footer_branch
      %15 = sbr.rel target = $region3
    $region8: #{tpu_custom_call.1} parent=1 // loop_exit
      _
    %576 = vsyncpa [#allocation3], 1
    %s577 = scalar_lea.sflag [#allocation3], 1
    %578 = vsyncpa %s577, 1

</llo_original>
